<compile_context>
chip_gen: v7x
topology: tpu7x:2x2x1
jax: 0.10.0
libtpu: 0.0.40
codegen_flags: <defaults>
</compile_context>

<pallas_src>
import functools

import jax
import jax.numpy as jnp
from jax import lax
from jax.experimental import pallas as pl
from jax.experimental.pallas import tpu as pltpu

EPS = 1e-3


def _round_up(v, m):
    return ((v + m - 1) // m) * m


@functools.lru_cache(maxsize=None)
def _vmem_budget_bytes():
    """Generation-aware scoped-VMEM limit.

    v5e/v6e (128 MiB physical) -> 96 MiB; v7x (64 MiB physical) -> 44 MiB;
    unknown / query failure -> conservative 44 MiB.
    """
    try:
        cap = int(pltpu.get_tpu_info().vmem_capacity_bytes)
    except Exception:
        cap = 64 * 1024 * 1024
    if cap >= 128 * 1024 * 1024:
        return 96 * 1024 * 1024
    return min(44 * 1024 * 1024, (cap * 3) // 4)


# ---------------------------------------------------------------------------
# Fused single-block path (slab fits VMEM): 1 HBM read + 1 HBM write of x.
# ---------------------------------------------------------------------------
def _fused_kernel(x_ref, p_ref, o_ref):
    # x_ref/o_ref: (N, C, HW) whole-slab VMEM resident; p_ref: (C, 3) = [gamma, beta, alpha]
    n_batch = x_ref.shape[0]
    hw = x_ref.shape[2]
    inv_count = 1.0 / float(n_batch * hw)

    # Single pass over x for both moments (var = E[x^2] - mean^2).
    s = None
    q = None
    for n in range(n_batch):
        xn = x_ref[n].astype(jnp.float32)
        s = xn if s is None else s + xn
        q = xn * xn if q is None else q + xn * xn
    mean = jnp.sum(s, axis=-1, keepdims=True) * inv_count                  # (C, 1)
    var = jnp.maximum(jnp.sum(q, axis=-1, keepdims=True) * inv_count - mean * mean, 0.0)

    gamma = p_ref[:, 0:1]
    beta = p_ref[:, 1:2]
    alpha = p_ref[:, 2:3]
    scale = gamma * lax.rsqrt(var + EPS)                                   # (C, 1)
    shift = beta - mean * scale

    for n in range(n_batch):
        y = x_ref[n].astype(jnp.float32) * scale + shift
        o_ref[n] = jnp.where(y > 0.0, y, alpha * y).astype(o_ref.dtype)


# ---------------------------------------------------------------------------
# Two-pass tiled path (large inputs). x viewed as (N*C, HW): (sub_mult,128)-dense
# tiles, cdiv grids with lane masking for ragged HW.
# ---------------------------------------------------------------------------
def _stats_kernel(x_ref, sum_ref, sq_ref, s_acc, q_acc, *, tile_hw, hw_true, needs_mask):
    # x_ref: (BR, T) tile. s_acc/q_acc: (BR, 128) f32 scratch accumulators that
    # persist across the reduction (lane) grid axis. At the final reduction
    # step the cross-lane reduce happens in-kernel and only (BR, 1) sums are
    # written out (tiny stats writeback).
    s_idx = pl.program_id(1)

    @pl.when(s_idx == 0)
    def _init():
        s_acc[...] = jnp.zeros_like(s_acc)
        q_acc[...] = jnp.zeros_like(q_acc)

    rows = x_ref.shape[0]
    nchunks = tile_hw // 128
    if needs_mask:
        lane0 = lax.broadcasted_iota(jnp.int32, (rows, 128), 1)
        base = s_idx * tile_hw

    s = None
    q = None
    for k in range(nchunks):
        xk = x_ref[:, k * 128:(k + 1) * 128].astype(jnp.float32)
        if needs_mask:
            xk = jnp.where(lane0 + (base + k * 128) < hw_true, xk, 0.0)
        s = xk if s is None else s + xk
        q = xk * xk if q is None else q + xk * xk
    s_acc[...] += s
    q_acc[...] += q

    @pl.when(s_idx == pl.num_programs(1) - 1)
    def _fin():
        sum_ref[...] = jnp.sum(s_acc[...], axis=-1, keepdims=True)
        sq_ref[...] = jnp.sum(q_acc[...], axis=-1, keepdims=True)


def _apply_kernel(x_ref, p_ref, o_ref):
    # x_ref/o_ref: (BR, T); p_ref: (BR, 3) = folded [scale, shift, alpha] per row.
    x = x_ref[...].astype(jnp.float32)
    scale = p_ref[:, 0:1]
    shift = p_ref[:, 1:2]
    alpha = p_ref[:, 2:3]
    y = x * scale + shift
    o_ref[...] = jnp.where(y > 0.0, y, alpha * y).astype(o_ref.dtype)


@functools.partial(jax.jit, static_argnames=("force_two_pass",))
def br_forward(x, gamma, beta, alpha, *, force_two_pass=False):
    """BR forward: training-mode BatchNorm2d(eps=1e-3) + per-channel PReLU.

    x: (N, C, H, W); gamma/beta/alpha: (C,)
    """
    N, C, H, W = x.shape
    HW = H * W
    NC = N * C
    gamma = gamma.astype(jnp.float32)
    beta = beta.astype(jnp.float32)
    alpha = alpha.astype(jnp.float32)

    itemsize = jnp.dtype(x.dtype).itemsize
    vmem_limit = _vmem_budget_bytes()

    # --- fused whole-slab path: budget = 2x in + 2x out blocks + f32 temps ---
    slab_bytes = NC * HW * itemsize
    fused_need = 4 * slab_bytes + 3 * C * HW * 4 + (4 << 20)
    if not force_two_pass and fused_need <= vmem_limit:
        x3 = x.reshape(N, C, HW)                                       # no copy
        params = jnp.stack([gamma, beta, alpha], axis=-1)              # (C, 3)
        out3 = pl.pallas_call(
            _fused_kernel,
            out_shape=jax.ShapeDtypeStruct((N, C, HW), x.dtype),
            grid=(1,),
            in_specs=[
                pl.BlockSpec((N, C, HW), lambda i: (0, 0, 0)),
                pl.BlockSpec((C, 3), lambda i: (0, 0)),
            ],
            out_specs=pl.BlockSpec((N, C, HW), lambda i: (0, 0, 0)),
            compiler_params=pltpu.CompilerParams(
                dimension_semantics=("arbitrary",),
                vmem_limit_bytes=vmem_limit,
            ),
        )(x3, params)
        return out3.reshape(N, C, H, W)

    # --- two-pass tiled path ---
    x2 = x.reshape(NC, HW)                                             # no copy

    # Row block: dtype-aware sublane multiple, capped at 64 (keeps the chunked
    # s/q accumulators at 16 vregs), and >= 2 row blocks when possible so the
    # "parallel" row axis can shard across v7x's two TensorCores.
    sub_mult = max(1, 32 // itemsize)          # 8 f32 / 16 bf16 / 32 int8-fp8
    br = max(sub_mult, min(64, _round_up(max(pl.cdiv(NC, 2), 1), sub_mult)))
    # Lane tile: fixed 128-multiple, up to 8192 lanes (~2 MiB/tile for f32).
    t = min(8192, _round_up(HW, 128))
    grid = (pl.cdiv(NC, br), pl.cdiv(HW, t))
    needs_mask = (HW % t) != 0

    # Pass 1: per-(n,c)-row sums / sums-of-squares, pipelined over HW.
    row_sum, row_sq = pl.pallas_call(
        functools.partial(_stats_kernel, tile_hw=t, hw_true=HW, needs_mask=needs_mask),
        out_shape=(jax.ShapeDtypeStruct((NC, 1), jnp.float32),
                   jax.ShapeDtypeStruct((NC, 1), jnp.float32)),
        grid=grid,
        in_specs=[pl.BlockSpec((br, t), lambda r, s: (r, s))],
        out_specs=(pl.BlockSpec((br, 1), lambda r, s: (r, 0)),
                   pl.BlockSpec((br, 1), lambda r, s: (r, 0))),
        scratch_shapes=[pltpu.VMEM((br, 128), jnp.float32),
                        pltpu.VMEM((br, 128), jnp.float32)],
        compiler_params=pltpu.CompilerParams(
            dimension_semantics=("parallel", "arbitrary"),
            vmem_limit_bytes=vmem_limit,
        ),
    )(x2)

    # Finalize stats (tiny) and fold BN affine into per-channel scale/shift.
    count = float(N * HW)
    sum_c = row_sum.reshape(N, C).sum(axis=0)
    sq_c = row_sq.reshape(N, C).sum(axis=0)
    mean = sum_c / count
    var = jnp.maximum(sq_c / count - mean * mean, 0.0)
    scale = gamma * lax.rsqrt(var + EPS)
    shift = beta - mean * scale
    prow = jnp.stack([scale, shift, alpha], axis=-1)                   # (C, 3)
    prow = jnp.broadcast_to(prow[None], (N, C, 3)).reshape(NC, 3)      # per (n,c) row

    # Pass 2: fully parallel apply (y = x*scale + shift, then PReLU).
    out2 = pl.pallas_call(
        _apply_kernel,
        out_shape=jax.ShapeDtypeStruct((NC, HW), x.dtype),
        grid=grid,
        in_specs=[
            pl.BlockSpec((br, t), lambda r, s: (r, s)),
            pl.BlockSpec((br, 3), lambda r, s: (r, 0)),
        ],
        out_specs=pl.BlockSpec((br, t), lambda r, s: (r, s)),
        compiler_params=pltpu.CompilerParams(
            dimension_semantics=("parallel", "parallel"),
            vmem_limit_bytes=vmem_limit,
        ),
    )(x2, prow)
    return out2.reshape(N, C, H, W)


def _reference(x, gamma, beta, alpha):
    m = jnp.mean(x, axis=(0, 2, 3), keepdims=True)
    v = jnp.mean((x - m) ** 2, axis=(0, 2, 3), keepdims=True)
    y = (x - m) * lax.rsqrt(v + EPS) * gamma[None, :, None, None] + beta[None, :, None, None]
    return jnp.where(y > 0, y, alpha[None, :, None, None] * y)


if __name__ == "__main__":
    key = jax.random.PRNGKey(0)
    N, C, H, W = 2, 4, 16, 16
    x = jax.random.normal(key, (N, C, H, W), dtype=jnp.float32)

    # Deterministic synthetic parameters (BN gamma/beta, PReLU alpha; PyTorch init 0.25).
    gamma = 1.0 + 0.1 * jnp.arange(C, dtype=jnp.float32)
    beta = 0.05 * jnp.arange(C, dtype=jnp.float32)
    alpha = 0.25 + 0.01 * jnp.arange(C, dtype=jnp.float32)

    ref = _reference(x, gamma, beta, alpha)

    # Fused (small-slab) path — the one this shape actually uses.
    out_fused = jax.block_until_ready(br_forward(x, gamma, beta, alpha))
    assert out_fused.shape == (N, C, H, W)
    assert jnp.allclose(out_fused, ref, atol=1e-5, rtol=1e-5)

    # Tiled two-pass path (used for large activations) — validate it too.
    out_tiled = jax.block_until_ready(
        br_forward(x, gamma, beta, alpha, force_two_pass=True))
    assert jnp.allclose(out_tiled, ref, atol=1e-5, rtol=1e-5)

    # TODO(synk): training-mode running_mean/running_var state updates are not
    # produced (forward output does not depend on them).
    print("KERNEL_OK")
</pallas_src>

<mosaic_0001>
module attributes {stable_mosaic.version = 11 : i64} {
  func.func @_fused_kernel(%arg0: i32, %arg1: memref<2x4x256xf32, #tpu.memory_space<vmem>>, %arg2: memref<4x3xf32, #tpu.memory_space<vmem>>, %arg3: memref<2x4x256xf32, #tpu.memory_space<vmem>>) attributes {dimension_semantics = [#tpu.dimension_semantics<arbitrary>], iteration_bounds = array<i64: 1>, scalar_prefetch = 0 : i64, scratch_operands = 0 : i64, tpu.core_type = #tpu.core_type<tc>, window_params = [{pipeline_mode = #tpu.pipeline_mode<synchronous>, transform_indices = @transform_0, window_bounds = array<i64: 2, 4, 256>}, {pipeline_mode = #tpu.pipeline_mode<synchronous>, transform_indices = @transform_1, window_bounds = array<i64: 4, 3>}, {pipeline_mode = #tpu.pipeline_mode<synchronous>, transform_indices = @transform_2, window_bounds = array<i64: 2, 4, 256>}]} {
    %c0 = arith.constant 0 : index
    %c0_0 = arith.constant 0 : index
    %c0_1 = arith.constant 0 : index
    %0 = vector.load %arg1[%c0, %c0_0, %c0_1] : memref<2x4x256xf32, #tpu.memory_space<vmem>>, vector<1x4x256xf32>
    %1 = vector.shape_cast %0 : vector<1x4x256xf32> to vector<4x256xf32>
    %2 = arith.mulf %1, %1 : vector<4x256xf32>
    %c1 = arith.constant 1 : index
    %c0_2 = arith.constant 0 : index
    %c0_3 = arith.constant 0 : index
    %3 = vector.load %arg1[%c1, %c0_2, %c0_3] : memref<2x4x256xf32, #tpu.memory_space<vmem>>, vector<1x4x256xf32>
    %4 = vector.shape_cast %3 : vector<1x4x256xf32> to vector<4x256xf32>
    %5 = arith.addf %1, %4 : vector<4x256xf32>
    %6 = arith.mulf %4, %4 : vector<4x256xf32>
    %7 = arith.addf %2, %6 : vector<4x256xf32>
    %cst = arith.constant dense<0.000000e+00> : vector<4xf32>
    %8 = vector.multi_reduction <add>, %5, %cst [1] : vector<4x256xf32> to vector<4xf32>
    %9 = vector.shape_cast %8 : vector<4xf32> to vector<4x1xf32>
    %cst_4 = arith.constant 0.001953125 : f32
    %10 = vector.broadcast %cst_4 : f32 to vector<4x1xf32>
    %11 = arith.mulf %9, %10 : vector<4x1xf32>
    %cst_5 = arith.constant dense<0.000000e+00> : vector<4xf32>
    %12 = vector.multi_reduction <add>, %7, %cst_5 [1] : vector<4x256xf32> to vector<4xf32>
    %13 = vector.shape_cast %12 : vector<4xf32> to vector<4x1xf32>
    %cst_6 = arith.constant 0.001953125 : f32
    %14 = vector.broadcast %cst_6 : f32 to vector<4x1xf32>
    %15 = arith.mulf %13, %14 : vector<4x1xf32>
    %16 = arith.mulf %11, %11 : vector<4x1xf32>
    %17 = arith.subf %15, %16 : vector<4x1xf32>
    %cst_7 = arith.constant 0.000000e+00 : f32
    %18 = vector.broadcast %cst_7 : f32 to vector<4x1xf32>
    %19 = arith.maximumf %17, %18 : vector<4x1xf32>
    %c0_8 = arith.constant 0 : index
    %c0_9 = arith.constant 0 : index
    %20 = vector.load %arg2[%c0_8, %c0_9] : memref<4x3xf32, #tpu.memory_space<vmem>>, vector<4x1xf32>
    %c0_10 = arith.constant 0 : index
    %c1_11 = arith.constant 1 : index
    %21 = vector.load %arg2[%c0_10, %c1_11] : memref<4x3xf32, #tpu.memory_space<vmem>>, vector<4x1xf32>
    %c0_12 = arith.constant 0 : index
    %c2 = arith.constant 2 : index
    %22 = vector.load %arg2[%c0_12, %c2] : memref<4x3xf32, #tpu.memory_space<vmem>>, vector<4x1xf32>
    %cst_13 = arith.constant 1.000000e-03 : f32
    %23 = vector.broadcast %cst_13 : f32 to vector<4x1xf32>
    %24 = arith.addf %19, %23 : vector<4x1xf32>
    %25 = math.rsqrt %24 : vector<4x1xf32>
    %26 = arith.mulf %20, %25 : vector<4x1xf32>
    %27 = arith.mulf %11, %26 : vector<4x1xf32>
    %28 = arith.subf %21, %27 : vector<4x1xf32>
    %c0_14 = arith.constant 0 : index
    %c0_15 = arith.constant 0 : index
    %c0_16 = arith.constant 0 : index
    %29 = vector.load %arg1[%c0_14, %c0_15, %c0_16] : memref<2x4x256xf32, #tpu.memory_space<vmem>>, vector<1x4x256xf32>
    %30 = vector.shape_cast %29 : vector<1x4x256xf32> to vector<4x256xf32>
    %31 = vector.broadcast %26 : vector<4x1xf32> to vector<4x256xf32>
    %32 = arith.mulf %30, %31 : vector<4x256xf32>
    %33 = vector.broadcast %28 : vector<4x1xf32> to vector<4x256xf32>
    %34 = arith.addf %32, %33 : vector<4x256xf32>
    %cst_17 = arith.constant 0.000000e+00 : f32
    %35 = vector.broadcast %cst_17 : f32 to vector<4x256xf32>
    %36 = arith.cmpf ogt, %34, %35 : vector<4x256xf32>
    %37 = vector.broadcast %22 : vector<4x1xf32> to vector<4x256xf32>
    %38 = arith.mulf %37, %34 : vector<4x256xf32>
    %39 = arith.select %36, %34, %38 : vector<4x256xi1>, vector<4x256xf32>
    %c0_18 = arith.constant 0 : index
    %c0_19 = arith.constant 0 : index
    %c0_20 = arith.constant 0 : index
    %40 = vector.load %arg3[%c0_18, %c0_19, %c0_20] : memref<2x4x256xf32, #tpu.memory_space<vmem>>, vector<1x4x256xf32>
    %41 = vector.shape_cast %40 : vector<1x4x256xf32> to vector<4x256xf32>
    %42 = vector.shape_cast %39 : vector<4x256xf32> to vector<1x4x256xf32>
    tpu.vector_store %arg3[%c0_18, %c0_19, %c0_20], %42 {strides = array<i32>} : memref<2x4x256xf32, #tpu.memory_space<vmem>>, vector<1x4x256xf32>,
    %c1_21 = arith.constant 1 : index
    %c0_22 = arith.constant 0 : index
    %c0_23 = arith.constant 0 : index
    %43 = vector.load %arg1[%c1_21, %c0_22, %c0_23] : memref<2x4x256xf32, #tpu.memory_space<vmem>>, vector<1x4x256xf32>
    %44 = vector.shape_cast %43 : vector<1x4x256xf32> to vector<4x256xf32>
    %45 = vector.broadcast %26 : vector<4x1xf32> to vector<4x256xf32>
    %46 = arith.mulf %44, %45 : vector<4x256xf32>
    %47 = vector.broadcast %28 : vector<4x1xf32> to vector<4x256xf32>
    %48 = arith.addf %46, %47 : vector<4x256xf32>
    %cst_24 = arith.constant 0.000000e+00 : f32
    %49 = vector.broadcast %cst_24 : f32 to vector<4x256xf32>
    %50 = arith.cmpf ogt, %48, %49 : vector<4x256xf32>
    %51 = vector.broadcast %22 : vector<4x1xf32> to vector<4x256xf32>
    %52 = arith.mulf %51, %48 : vector<4x256xf32>
    %53 = arith.select %50, %48, %52 : vector<4x256xi1>, vector<4x256xf32>
    %c1_25 = arith.constant 1 : index
    %c0_26 = arith.constant 0 : index
    %c0_27 = arith.constant 0 : index
    %54 = vector.load %arg3[%c1_25, %c0_26, %c0_27] : memref<2x4x256xf32, #tpu.memory_space<vmem>>, vector<1x4x256xf32>
    %55 = vector.shape_cast %54 : vector<1x4x256xf32> to vector<4x256xf32>
    %56 = vector.shape_cast %53 : vector<4x256xf32> to vector<1x4x256xf32>
    tpu.vector_store %arg3[%c1_25, %c0_26, %c0_27], %56 {strides = array<i32>} : memref<2x4x256xf32, #tpu.memory_space<vmem>>, vector<1x4x256xf32>,
    return
  }
  func.func @transform_0(%arg0: i32) -> (i32, i32, i32) {
    %c0_i32 = arith.constant 0 : i32
    %c0_i32_0 = arith.constant 0 : i32
    %c0_i32_1 = arith.constant 0 : i32
    %c0_i32_2 = arith.constant 0 : i32
    return %c0_i32, %c0_i32_0, %c0_i32_1 : i32, i32, i32
  }
  func.func @transform_1(%arg0: i32) -> (i32, i32) {
    %c0_i32 = arith.constant 0 : i32
    %c0_i32_0 = arith.constant 0 : i32
    %c0_i32_1 = arith.constant 0 : i32
    return %c0_i32, %c0_i32_0 : i32, i32
  }
  func.func @transform_2(%arg0: i32) -> (i32, i32, i32) {
    %c0_i32 = arith.constant 0 : i32
    %c0_i32_0 = arith.constant 0 : i32
    %c0_i32_1 = arith.constant 0 : i32
    %c0_i32_2 = arith.constant 0 : i32
    return %c0_i32, %c0_i32_0, %c0_i32_1 : i32, i32, i32
  }
}

</mosaic_0001>

<llo_original>
// kernel: br_forward.1
$region0: #{br_forward.1}
  #allocation0 [shape = 'u32[]', space=smem, size = 0x4, offset = 0x4, fixed_abs, tag = 'smem constant byte address 0x4 - core index']
  #allocation1 [shape = 'u32[144,128]{1,0:T(1,128)}', space=vmem, size = 0x12000, scoped, tag = 'internal scratch']
  %s0 = inlined_call_operand.vmem [shape: f32[2,4,256], index: 0, kind: input, shape index: {}]
  %s1 = inlined_call_operand.vmem [shape: f32[4,3], index: 1, kind: input, shape index: {}]
  %s2 = inlined_call_operand.vmem [shape: f32[2,4,256], index: 2, kind: output, shape index: {}]
  %s3 = sld [smem:[#allocation0]]
  $region18: #{br_forward.1} parent=0
    _
  %s5 = ssub.s32 1, %s3
  %s6 = scalar_select 0, %s5, %s3
  // Predicated region
  $region2: #{br_forward.1} parent=0 // pred_check
    _
  $region3: #{br_forward.1} parent=0 // pred_check_branch
    %8 = sbr.rel (0) target = $region5
  $region4: #{br_forward.1} parent=0 // pred_region
    _
  $region5: #{br_forward.1} parent=0 // pred_fallthru
    _
  // Predicated region
  $region6: #{br_forward.1} parent=0 // pred_check
    _
  $region7: #{br_forward.1} parent=0 // pred_check_branch
    %10 = sbr.rel (0) target = $region9
  $region8: #{br_forward.1} parent=0 // pred_region
    _
  $region9: #{br_forward.1} parent=0 // pred_fallthru
    _
  %v11 = vld [vmem:[%s0] sm:$0xff]
  %v12 = vmul.f32 %v11, %v11
  %s13 = scalar_lea.vmem %s0, 8
  %v14 = vld [vmem:[%s13] sm:$0xff]
  %v15 = vadd.f32 %v11, %v14
  %v16 = vmul.f32 %v14, %v14
  %v17 = vadd.f32 %v12, %v16
  %v19 = vcombine.high %v15, %v15
  %vm21 = vcmask 1043456
  %v22 = vsel %vm21, %v15, 0.0
  %v23 = vsel %vm21, %v19, 0.0
  %v24 = vadd.f32 %v22, %v23
  %25 = vadd.xlane.f32.xlu0 %v24
  %v26 = vpop.xlane.xlu0 %25
  %v27 = vmul.f32 %v26, 0.001953125
  %v29 = vcombine.high %v17, %v17
  %v31 = vsel %vm21, %v17, 0.0
  %v32 = vsel %vm21, %v29, 0.0
  %v33 = vadd.f32 %v31, %v32
  %34 = vadd.xlane.f32.xlu0 %v33
  %v35 = vpop.xlane.xlu0 %34
  %v36 = vmul.f32 %v35, 0.001953125
  %v37 = vmul.f32 %v27, %v27
  %v38 = vsub.f32 %v36, %v37
  %v39 = vmax.f32 %v38, 0.0
  %v40 = vld [vmem:[%s1] sm:$0xf]
  %v41 = vadd.f32 %v39, 0.001
  %v42 = vrsqrt.pop %v41
  %v43 = vmul.f32 %v40, %v42
  %v44 = vmul.f32 %v27, %v43
  %46 = vrot.lane.b32.xlu0 %v44, 1
  %v47 = vpop.permute.xlu0 %46
  %v49 = vsub.f32 %v40, %v47
  %51 = vset.pattern.permute.xlu0 0
  %52 = vperm.xlu0 %51, %v43
  %v53 = vpop.permute.xlu0 %52
  %v55 = vunpack.c.l.s4 839922192
  %v56 = vunpack.c.0.s8 %v55
  %v57 = vlaneseq
  %v58 = vshrl.u32 %v57, 7
  %v59 = vsub.s32 %v56, %v58
  %v60 = vrot.slane %v53, %v59
  %v62 = vmul.f32 %v11, %v60
  %64 = vset.pattern.permute.xlu0 1
  %65 = vperm.xlu0 %64, %v49
  %v66 = vpop.permute.xlu0 %65
  %v68 = vunpack.c.l.s4 839922192
  %v69 = vunpack.c.0.s8 %v68
  %v70 = vlaneseq
  %v71 = vshrl.u32 %v70, 7
  %v72 = vsub.s32 %v69, %v71
  %v73 = vrot.slane %v66, %v72
  %v75 = vadd.f32 %v62, %v73
  %vm76 = vcmp.gt.f32.partialorder %v75, 0.0
  %78 = vset.pattern.permute.xlu0 2
  %79 = vperm.xlu0 %78, %v40
  %v80 = vpop.permute.xlu0 %79
  %v83 = vcombine.high %v75, %v75
  %v85 = vmul.f32 %v80, %v75
  %v86 = vmul.f32 %v80, %v83
  %v89 = vcombine.low %v85, %v86
  %v91 = vsel %vm76, %v75, %v89
  %92 = vst [vmem:[%s2] sm:$0xff] %v91
  %v93 = vld [vmem:[%s13] sm:$0xff]
  %v94 = vmul.f32 %v93, %v60
  %v95 = vadd.f32 %v94, %v73
  %vm96 = vcmp.gt.f32.partialorder %v95, 0.0
  %v98 = vcombine.high %v95, %v95
  %v100 = vmul.f32 %v80, %v95
  %v101 = vmul.f32 %v80, %v98
  %v104 = vcombine.low %v100, %v101
  %v106 = vsel %vm96, %v95, %v104
  %s107 = scalar_lea.vmem %s2, 8
  %108 = vst [vmem:[%s107] sm:$0xff] %v106
  // Predicated region
  $region10: #{br_forward.1} parent=0 // pred_check
    _
  $region11: #{br_forward.1} parent=0 // pred_check_branch
    %110 = sbr.rel (0) target = $region13
  $region12: #{br_forward.1} parent=0 // pred_region
    _
  $region13: #{br_forward.1} parent=0 // pred_fallthru
    _
  // Predicated region
  $region14: #{br_forward.1} parent=0 // pred_check
    _
  $region15: #{br_forward.1} parent=0 // pred_check_branch
    %112 = sbr.rel (0) target = $region17
  $region16: #{br_forward.1} parent=0 // pred_region
    _
  $region17: #{br_forward.1} parent=0 // pred_fallthru
    _

</llo_original>
